<compile_context>
chip_gen: v5e
topology: v5e:2x2
jax: 0.10.0
libtpu: 0.0.40
codegen_flags: <defaults>
</compile_context>

<pallas_src>
import functools

import jax
import jax.numpy as jnp
from jax.experimental import pallas as pl
from jax.experimental.pallas import tpu as pltpu


def _vm_attention_kernel(vq_ref, x_ref, wq_ref, wkv_ref, wproj_ref, bproj_ref,
                         mask_ref, o_ref, *, batch_tile, n_agg, n_inp,
                         num_heads, head_dim, matmul_dtype):
    bt, n_a, n_i = batch_tile, n_agg, n_inp
    C = num_heads * head_dim
    m = num_heads * n_i

    # ---- fused projections; batch folded into the GEMM M dimension ----------
    # (softmax scale is already folded into wq_ref at weight-prep time)
    q = jnp.dot(vq_ref[...], wq_ref[...], preferred_element_type=jnp.float32)
    kv = jnp.dot(x_ref[...], wkv_ref[...], preferred_element_type=jnp.float32)

    q3 = q.reshape(bt, n_a, C)               # free leading-dim splits
    k3 = kv[:, :C].reshape(bt, n_i, C)
    v3 = kv[:, C:].reshape(bt, n_i, C)

    # ---- block-diagonal K / V: all heads in TWO matmuls ----------------------
    # mask[h*n_i + j, c] = 1 iff channel c belongs to head h.  Tiling K/V
    # num_heads times along the sublane axis and masking places head h's keys
    # at score lanes [h*n_i, (h+1)*n_i) and head h's values at context lanes
    # [h*head_dim, (h+1)*head_dim) — no per-head 4-lane slicing / concatenation.
    mask = mask_ref[...]
    k_bd = jnp.concatenate([k3] * num_heads, axis=1) * mask   # (bt, m, C)
    v_bd = jnp.concatenate([v3] * num_heads, axis=1) * mask   # (bt, m, C)

    if matmul_dtype is not None:
        q3 = q3.astype(matmul_dtype)
        k_bd = k_bd.astype(matmul_dtype)
        v_bd = v_bd.astype(matmul_dtype)

    # scores for all heads at once: lane-dense (bt, n_a, H*n_i)
    s = jnp.einsum('bqc,bmc->bqm', q3, k_bd,
                   preferred_element_type=jnp.float32)

    # Softmax stays f32.  A single per-row max (over all heads) is enough for
    # exp stability — softmax is shift-invariant per row — and avoids a
    # segmented per-n_i-lane max.
    s = s - jnp.max(s, axis=-1, keepdims=True)
    p = jnp.exp(s)
    pm = p.astype(matmul_dtype) if matmul_dtype is not None else p

    # Unnormalised per-head context, already in the final head-major lane
    # layout, plus lane-aligned per-head softmax denominators via p @ mask.
    ctx = jnp.einsum('bqm,bmc->bqc', pm, v_bd,
                     preferred_element_type=jnp.float32)       # (bt, n_a, C)
    denom = jnp.dot(pm.reshape(bt * n_a, m), mask,
                    preferred_element_type=jnp.float32)        # (bt*n_a, C)
    ctx = ctx.reshape(bt * n_a, C) * pl.reciprocal(denom, approx=True)

    # ---- output projection + bias --------------------------------------------
    if matmul_dtype is not None:
        ctx = ctx.astype(matmul_dtype)
    out = jnp.dot(ctx, wproj_ref[...], preferred_element_type=jnp.float32)
    o_ref[...] = (out + bproj_ref[...]).astype(o_ref.dtype)
    # TODO(synk): expose the output as (B, N_a*C) for a fully lane-dense store
    # once a bundle dump confirms the in-kernel sublane->lane repack is cheaper
    # than the masked 32-lane stores.


def _head_block_mask(num_heads, head_dim, n_i, dtype=jnp.float32):
    """(num_heads*n_i, C) block-diagonal head mask: row h*n_i+j hits channels of head h."""
    C = num_heads * head_dim
    row_head = jnp.arange(num_heads * n_i, dtype=jnp.int32) // n_i
    col_head = jnp.arange(C, dtype=jnp.int32) // head_dim
    return (row_head[:, None] == col_head[None, :]).astype(dtype)


def _pick_batch_tile(B, n_a, n_i, C, num_heads, itemsize,
                     target_rows=1024, vmem_budget_bytes=16 * 1024 * 1024):
    """Batch-tile size from a padded-VMEM-footprint budget (C pads to 128 lanes)."""
    lane = 128
    pc = -(-C // lane) * lane                    # C padded to the 128-lane width
    m = num_heads * n_i
    pm = -(-m // lane) * lane
    f32 = 4
    io = 2 * (2 * n_a + n_i) * pc * itemsize     # double-buffered vq/x/out tiles
    proj = (n_a + 2 * n_i) * pc * f32            # q, kv (f32 accumulators)
    bdiag = 2 * 2 * m * pc * f32                 # k_bd / v_bd (+ unmasked temps)
    attn = 2 * n_a * pm * f32 + 2 * n_a * pc * f32   # s/p and ctx/denom
    per_batch = max(1, io + proj + bdiag + attn)

    bt = max(1, min(B, vmem_budget_bytes // per_batch,
                    max(1, target_rows // max(n_a, n_i, 1))))
    if B > 1 and bt >= B:
        bt = (B + 1) // 2            # keep >= 2 grid steps so both v7x cores get work
    if (bt * n_a) % 8 or (bt * n_i) % 8:
        bt = B                        # full-array blocks sidestep the (8,128) rule

    vmem_limit = int(min(48 * 1024 * 1024,
                         max(32 * 1024 * 1024, 2 * bt * per_batch + (2 << 20))))
    return bt, vmem_limit


def prepare_vm_attention_params(wq_t, wkv_t, wproj_t, bproj, *, num_heads,
                                matmul_dtype=None):
    """One-off weight prep: fold the softmax scale into Wq, reshape the proj
    bias, and (optionally) cast the GEMM weights to the MXU operand dtype.
    Weights are stored transposed, (in_features, out_features), so y = x @ W."""
    C = wq_t.shape[0]
    head_dim = C // num_heads
    wq_t = wq_t * (head_dim ** -0.5)             # fold q-scale into the projection
    bproj2d = bproj.reshape(1, C).astype(jnp.float32)
    if matmul_dtype is not None:
        wq_t = wq_t.astype(matmul_dtype)
        wkv_t = wkv_t.astype(matmul_dtype)
        wproj_t = wproj_t.astype(matmul_dtype)
    return (wq_t, wkv_t, wproj_t, bproj2d)


def variable_mapping_attention(var_query, x, params, *, num_heads,
                               matmul_dtype=None):
    """var_query: (B, N_a, C), x: (B, N_i, C); params from prepare_vm_attention_params."""
    wq_t, wkv_t, wproj_t, bproj2d = params
    B, N_a, C = var_query.shape
    _, N_i, _ = x.shape
    head_dim = C // num_heads
    out_dtype = var_query.dtype

    # matmul_dtype=jnp.bfloat16 keeps f32 accumulation / softmax but halves
    # activation+weight HBM traffic and uses the bf16-native MXU (v5e/v6e/v7x).
    if matmul_dtype is not None:
        var_query = var_query.astype(matmul_dtype)
        x = x.astype(matmul_dtype)

    itemsize = jnp.dtype(var_query.dtype).itemsize
    bt, vmem_limit = _pick_batch_tile(B, N_a, N_i, C, num_heads, itemsize)
    n_steps = -(-B // bt)
    B_pad = n_steps * bt

    # 2-D (rows, C) presentation: dense sublanes, one contiguous DMA per tile.
    vq2d = var_query.reshape(B * N_a, C)
    x2d = x.reshape(B * N_i, C)
    if B_pad != B:                                # pad awkward batch sizes
        vq2d = jnp.pad(vq2d, ((0, (B_pad - B) * N_a), (0, 0)))
        x2d = jnp.pad(x2d, ((0, (B_pad - B) * N_i), (0, 0)))

    mask_dtype = matmul_dtype if matmul_dtype is not None else jnp.float32
    head_mask = _head_block_mask(num_heads, head_dim, N_i, dtype=mask_dtype)
    m = num_heads * N_i

    kernel = functools.partial(
        _vm_attention_kernel, batch_tile=bt, n_agg=N_a, n_inp=N_i,
        num_heads=num_heads, head_dim=head_dim, matmul_dtype=matmul_dtype)

    # TODO(synk): for very long N_i a flash-style (blocked K/V, online softmax)
    # inner loop would be needed; here N_i is the (small) number of variables.
    out2d = pl.pallas_call(
        kernel,
        out_shape=jax.ShapeDtypeStruct((B_pad * N_a, C), out_dtype),
        grid=(n_steps,),
        in_specs=[
            pl.BlockSpec((bt * N_a, C), lambda i: (i, 0)),      # var_query rows
            pl.BlockSpec((bt * N_i, C), lambda i: (i, 0)),      # x rows
            pl.BlockSpec((C, C), lambda i: (0, 0)),             # Wq^T * scale (resident)
            pl.BlockSpec((C, 2 * C), lambda i: (0, 0)),         # fused Wkv^T
            pl.BlockSpec((C, C), lambda i: (0, 0)),             # Wproj^T
            pl.BlockSpec((1, C), lambda i: (0, 0)),             # proj bias
            pl.BlockSpec((m, C), lambda i: (0, 0)),             # head block mask
        ],
        out_specs=pl.BlockSpec((bt * N_a, C), lambda i: (i, 0)),
        compiler_params=pltpu.CompilerParams(
            dimension_semantics=("parallel",),
            vmem_limit_bytes=vmem_limit),
    )(vq2d, x2d, wq_t, wkv_t, wproj_t, bproj2d, head_mask)

    out2d = out2d[:B * N_a]
    return out2d.reshape(B, N_a, C)


def _reference(var_query, x, wq_t, wkv_t, wproj_t, bproj, *, num_heads):
    """Plain-JAX reference mirroring the PyTorch forward (FusedAttn.NONE)."""
    B, N_a, C = var_query.shape
    _, N_i, _ = x.shape
    head_dim = C // num_heads
    scale = head_dim ** -0.5

    q = var_query @ wq_t                                  # (B, N_a, C)
    kv = x @ wkv_t                                        # (B, N_i, 2C)
    k, v = kv[..., :C], kv[..., C:]

    q = q.reshape(B, N_a, num_heads, head_dim).transpose(0, 2, 1, 3)
    k = k.reshape(B, N_i, num_heads, head_dim).transpose(0, 2, 1, 3)
    v = v.reshape(B, N_i, num_heads, head_dim).transpose(0, 2, 1, 3)

    attn = (q * scale) @ jnp.swapaxes(k, -2, -1)          # (B, H, N_a, N_i)
    attn = jax.nn.softmax(attn, axis=-1)
    o = attn @ v                                          # (B, H, N_a, Dh)
    o = o.transpose(0, 2, 1, 3).reshape(B, N_a, C)
    return o @ wproj_t + bproj


if __name__ == "__main__":
    # Small shapes consistent with the module: dim=32, num_heads=8 -> head_dim=4
    B, N_a, N_i, C, H = 2, 8, 16, 32, 8

    key = jax.random.PRNGKey(0)
    k1, k2, k3, k4, k5, k6 = jax.random.split(key, 6)

    var_query = jax.random.normal(k1, (B, N_a, C), dtype=jnp.float32)
    x = jax.random.normal(k2, (B, N_i, C), dtype=jnp.float32)

    # PyTorch Linear stores (out, in); we keep the transposed (in, out) layout
    # so the kernel computes y = x @ W.
    wq_t = jax.random.normal(k3, (C, C), dtype=jnp.float32) * 0.2        # q.weight^T
    wkv_t = jax.random.normal(k4, (C, 2 * C), dtype=jnp.float32) * 0.2   # kv.weight^T
    wproj_t = jax.random.normal(k5, (C, C), dtype=jnp.float32) * 0.2     # proj.weight^T
    bproj = jax.random.normal(k6, (C,), dtype=jnp.float32) * 0.2         # proj.bias

    params = prepare_vm_attention_params(wq_t, wkv_t, wproj_t, bproj, num_heads=H)
    out = variable_mapping_attention(var_query, x, params, num_heads=H)
    out = jax.block_until_ready(out)

    ref = _reference(var_query, x, wq_t, wkv_t, wproj_t, bproj, num_heads=H)
    assert out.shape == (B, N_a, C)
    # approx=True softmax reciprocal -> slightly looser tolerance than exact path
    assert jnp.allclose(out, ref, rtol=1e-2, atol=1e-2), "mismatch vs reference"

    print("KERNEL_OK")
</pallas_src>

<mosaic_0001>
module attributes {stable_mosaic.version = 11 : i64} {
  func.func @_vm_attention_kernel(%arg0: i32, %arg1: memref<8x32xf32, #tpu.memory_space<vmem>>, %arg2: memref<16x32xf32, #tpu.memory_space<vmem>>, %arg3: memref<32x32xf32, #tpu.memory_space<vmem>>, %arg4: memref<32x64xf32, #tpu.memory_space<vmem>>, %arg5: memref<32x32xf32, #tpu.memory_space<vmem>>, %arg6: memref<1x32xf32, #tpu.memory_space<vmem>>, %arg7: memref<128x32xf32, #tpu.memory_space<vmem>>, %arg8: memref<8x32xf32, #tpu.memory_space<vmem>>) attributes {dimension_semantics = [#tpu.dimension_semantics<parallel>], iteration_bounds = array<i64: 2>, scalar_prefetch = 0 : i64, scratch_operands = 0 : i64, tpu.core_type = #tpu.core_type<tc>, window_params = [{transform_indices = @transform_0, window_bounds = array<i64: 8, 32>}, {transform_indices = @transform_1, window_bounds = array<i64: 16, 32>}, {pipeline_mode = #tpu.pipeline_mode<synchronous>, transform_indices = @transform_2, window_bounds = array<i64: 32, 32>}, {pipeline_mode = #tpu.pipeline_mode<synchronous>, transform_indices = @transform_3, window_bounds = array<i64: 32, 64>}, {pipeline_mode = #tpu.pipeline_mode<synchronous>, transform_indices = @transform_4, window_bounds = array<i64: 32, 32>}, {pipeline_mode = #tpu.pipeline_mode<synchronous>, transform_indices = @transform_5, window_bounds = array<i64: 1, 32>}, {pipeline_mode = #tpu.pipeline_mode<synchronous>, transform_indices = @transform_6, window_bounds = array<i64: 128, 32>}, {transform_indices = @transform_7, window_bounds = array<i64: 8, 32>}]} {
    %c0 = arith.constant 0 : index
    %c0_0 = arith.constant 0 : index
    %0 = vector.load %arg1[%c0, %c0_0] : memref<8x32xf32, #tpu.memory_space<vmem>>, vector<8x32xf32>
    %c0_1 = arith.constant 0 : index
    %c0_2 = arith.constant 0 : index
    %1 = vector.load %arg3[%c0_1, %c0_2] : memref<32x32xf32, #tpu.memory_space<vmem>>, vector<32x32xf32>
    %cst = arith.constant dense<0.000000e+00> : vector<8x32xf32>
    %2 = tpu.matmul %0, %1, %cst {dimension_numbers = #tpu.dot_dimension_numbers<[1], [0], [0], [1], [0, 0, 1, 1], [], []>} : vector<8x32xf32>, vector<32x32xf32>, vector<8x32xf32> -> vector<8x32xf32>
    %c0_3 = arith.constant 0 : index
    %c0_4 = arith.constant 0 : index
    %3 = vector.load %arg2[%c0_3, %c0_4] : memref<16x32xf32, #tpu.memory_space<vmem>>, vector<16x32xf32>
    %c0_5 = arith.constant 0 : index
    %c0_6 = arith.constant 0 : index
    %4 = vector.load %arg4[%c0_5, %c0_6] : memref<32x64xf32, #tpu.memory_space<vmem>>, vector<32x64xf32>
    %cst_7 = arith.constant dense<0.000000e+00> : vector<16x64xf32>
    %5 = tpu.matmul %3, %4, %cst_7 {dimension_numbers = #tpu.dot_dimension_numbers<[1], [0], [0], [1], [0, 0, 1, 1], [], []>} : vector<16x32xf32>, vector<32x64xf32>, vector<16x64xf32> -> vector<16x64xf32>
    %6 = vector.shape_cast %2 : vector<8x32xf32> to vector<1x8x32xf32>
    %7 = vector.extract_strided_slice %5 {offsets = [0, 0], sizes = [16, 32], strides = [1, 1]} : vector<16x64xf32> to vector<16x32xf32>
    %8 = vector.shape_cast %7 : vector<16x32xf32> to vector<1x16x32xf32>
    %9 = vector.extract_strided_slice %5 {offsets = [0, 32], sizes = [16, 32], strides = [1, 1]} : vector<16x64xf32> to vector<16x32xf32>
    %10 = vector.shape_cast %9 : vector<16x32xf32> to vector<1x16x32xf32>
    %c0_8 = arith.constant 0 : index
    %c0_9 = arith.constant 0 : index
    %11 = vector.load %arg7[%c0_8, %c0_9] : memref<128x32xf32, #tpu.memory_space<vmem>>, vector<128x32xf32>
    %12 = tpu.concatenate %8, %8, %8, %8, %8, %8, %8, %8 in 1 : vector<1x16x32xf32>, vector<1x16x32xf32>, vector<1x16x32xf32>, vector<1x16x32xf32>, vector<1x16x32xf32>, vector<1x16x32xf32>, vector<1x16x32xf32>, vector<1x16x32xf32> -> vector<1x128x32xf32>
    %13 = vector.shape_cast %11 : vector<128x32xf32> to vector<1x128x32xf32>
    %14 = arith.mulf %12, %13 : vector<1x128x32xf32>
    %15 = tpu.concatenate %10, %10, %10, %10, %10, %10, %10, %10 in 1 : vector<1x16x32xf32>, vector<1x16x32xf32>, vector<1x16x32xf32>, vector<1x16x32xf32>, vector<1x16x32xf32>, vector<1x16x32xf32>, vector<1x16x32xf32>, vector<1x16x32xf32> -> vector<1x128x32xf32>
    %16 = vector.shape_cast %11 : vector<128x32xf32> to vector<1x128x32xf32>
    %17 = arith.mulf %15, %16 : vector<1x128x32xf32>
    "tpu.trace_start"() <{level = 10 : i32, message = "bqc,bmc->bqm"}> : () -> ()
    %cst_10 = arith.constant dense<0.000000e+00> : vector<1x8x128xf32>
    %18 = tpu.matmul %6, %14, %cst_10 {dimension_numbers = #tpu.dot_dimension_numbers<[2], [2], [1], [1], [0, 0, 0, 1, 1, 1], [0], [0]>} : vector<1x8x32xf32>, vector<1x128x32xf32>, vector<1x8x128xf32> -> vector<1x8x128xf32>
    "tpu.trace_stop"() : () -> ()
    %cst_11 = arith.constant dense<0xFF800000> : vector<1x8xf32>
    %19 = vector.multi_reduction <maximumf>, %18, %cst_11 [2] : vector<1x8x128xf32> to vector<1x8xf32>
    %20 = vector.shape_cast %19 : vector<1x8xf32> to vector<1x8x1xf32>
    %21 = vector.broadcast %20 : vector<1x8x1xf32> to vector<1x8x128xf32>
    %22 = arith.subf %18, %21 : vector<1x8x128xf32>
    %23 = math.exp %22 : vector<1x8x128xf32>
    "tpu.trace_start"() <{level = 10 : i32, message = "bqm,bmc->bqc"}> : () -> ()
    %cst_12 = arith.constant dense<0.000000e+00> : vector<1x8x32xf32>
    %24 = tpu.matmul %23, %17, %cst_12 {dimension_numbers = #tpu.dot_dimension_numbers<[2], [1], [1], [2], [0, 0, 0, 1, 1, 2], [0], [0]>} : vector<1x8x128xf32>, vector<1x128x32xf32>, vector<1x8x32xf32> -> vector<1x8x32xf32>
    "tpu.trace_stop"() : () -> ()
    %25 = vector.shape_cast %23 : vector<1x8x128xf32> to vector<8x128xf32>
    %cst_13 = arith.constant dense<0.000000e+00> : vector<8x32xf32>
    %26 = tpu.matmul %25, %11, %cst_13 {dimension_numbers = #tpu.dot_dimension_numbers<[1], [0], [0], [1], [0, 0, 1, 1], [], []>} : vector<8x128xf32>, vector<128x32xf32>, vector<8x32xf32> -> vector<8x32xf32>
    %27 = vector.shape_cast %24 : vector<1x8x32xf32> to vector<8x32xf32>
    %28 = tpu.reciprocal %26 {approx = true} : vector<8x32xf32> -> vector<8x32xf32>
    %29 = arith.mulf %27, %28 : vector<8x32xf32>
    %c0_14 = arith.constant 0 : index
    %c0_15 = arith.constant 0 : index
    %30 = vector.load %arg5[%c0_14, %c0_15] : memref<32x32xf32, #tpu.memory_space<vmem>>, vector<32x32xf32>
    %cst_16 = arith.constant dense<0.000000e+00> : vector<8x32xf32>
    %31 = tpu.matmul %29, %30, %cst_16 {dimension_numbers = #tpu.dot_dimension_numbers<[1], [0], [0], [1], [0, 0, 1, 1], [], []>} : vector<8x32xf32>, vector<32x32xf32>, vector<8x32xf32> -> vector<8x32xf32>
    %c0_17 = arith.constant 0 : index
    %c0_18 = arith.constant 0 : index
    %32 = vector.load %arg6[%c0_17, %c0_18] : memref<1x32xf32, #tpu.memory_space<vmem>>, vector<1x32xf32>
    %33 = vector.broadcast %32 : vector<1x32xf32> to vector<8x32xf32>
    %34 = arith.addf %31, %33 : vector<8x32xf32>
    %c0_19 = arith.constant 0 : index
    %c0_20 = arith.constant 0 : index
    %35 = vector.load %arg8[%c0_19, %c0_20] : memref<8x32xf32, #tpu.memory_space<vmem>>, vector<8x32xf32>
    tpu.vector_store %arg8[%c0_19, %c0_20], %34 {strides = array<i32>} : memref<8x32xf32, #tpu.memory_space<vmem>>, vector<8x32xf32>,
    return
  }
  func.func @transform_0(%arg0: i32) -> (i32, i32) {
    %c0_i32 = arith.constant 0 : i32
    %c0_i32_0 = arith.constant 0 : i32
    return %arg0, %c0_i32 : i32, i32
  }
  func.func @transform_1(%arg0: i32) -> (i32, i32) {
    %c0_i32 = arith.constant 0 : i32
    %c0_i32_0 = arith.constant 0 : i32
    return %arg0, %c0_i32 : i32, i32
  }
  func.func @transform_2(%arg0: i32) -> (i32, i32) {
    %c0_i32 = arith.constant 0 : i32
    %c0_i32_0 = arith.constant 0 : i32
    %c0_i32_1 = arith.constant 0 : i32
    return %c0_i32, %c0_i32_0 : i32, i32
  }
  func.func @transform_3(%arg0: i32) -> (i32, i32) {
    %c0_i32 = arith.constant 0 : i32
    %c0_i32_0 = arith.constant 0 : i32
    %c0_i32_1 = arith.constant 0 : i32
    return %c0_i32, %c0_i32_0 : i32, i32
  }
  func.func @transform_4(%arg0: i32) -> (i32, i32) {
    %c0_i32 = arith.constant 0 : i32
    %c0_i32_0 = arith.constant 0 : i32
    %c0_i32_1 = arith.constant 0 : i32
    return %c0_i32, %c0_i32_0 : i32, i32
  }
  func.func @transform_5(%arg0: i32) -> (i32, i32) {
    %c0_i32 = arith.constant 0 : i32
    %c0_i32_0 = arith.constant 0 : i32
    %c0_i32_1 = arith.constant 0 : i32
    return %c0_i32, %c0_i32_0 : i32, i32
  }
  func.func @transform_6(%arg0: i32) -> (i32, i32) {
    %c0_i32 = arith.constant 0 : i32
    %c0_i32_0 = arith.constant 0 : i32
    %c0_i32_1 = arith.constant 0 : i32
    return %c0_i32, %c0_i32_0 : i32, i32
  }
  func.func @transform_7(%arg0: i32) -> (i32, i32) {
    %c0_i32 = arith.constant 0 : i32
    %c0_i32_0 = arith.constant 0 : i32
    return %arg0, %c0_i32 : i32, i32
  }
}

</mosaic_0001>

<llo_original>
// kernel: tpu_custom_call.1
$region0: #{tpu_custom_call.1}
  #allocation0 [shape = 'u32[]', space=smem, size = 0x4, offset = 0x4, fixed_abs, tag = 'smem constant byte address 0x4 - core index']
  #allocation1 [shape = 'u32[72,128]{1,0:T(1,128)}', space=vmem, size = 0x9000, scoped, tag = 'internal scratch']
  %s0 = inlined_call_operand.vmem [shape: f32[16,32], index: 0, kind: input, shape index: {}]
  %s1 = inlined_call_operand.vmem [shape: f32[32,32], index: 1, kind: input, shape index: {}]
  %s2 = inlined_call_operand.vmem [shape: f32[32,32], index: 2, kind: input, shape index: {}]
  %s3 = inlined_call_operand.vmem [shape: f32[32,64], index: 3, kind: input, shape index: {}]
  %s4 = inlined_call_operand.vmem [shape: f32[32,32], index: 4, kind: input, shape index: {}]
  %s5 = inlined_call_operand.vmem [shape: f32[1,32], index: 5, kind: input, shape index: {}]
  %s6 = inlined_call_operand.vmem [shape: f32[128,32], index: 6, kind: input, shape index: {}]
  %s7 = inlined_call_operand.hbm [shape: f32[16,32], index: 7, kind: output, shape index: {}]
  %s8 = sld [smem:[#allocation0]]
  $region61: #{tpu_custom_call.1} parent=0
    _
  %s10 = ssub.s32 1, %s8
  %s11 = scalar_select 0, %s10, %s8
  $region1: #{tpu_custom_call.1} parent=0
    #allocation2 [shape = 'u8[8192]{0}', space=vmem, size = 0x2000, scoped, tag = 'output window, operand 0']
    #allocation3 [shape = 's32[2]{0}', space=sflag, size = 0x8, scoped, tag = 'scoped memory for tpu_custom_call.1']
    %12 = vsyncpa [#allocation3], 0
    %s13 = scalar_lea.sflag [#allocation3], 1
    %14 = vsyncpa %s13, 0
    loop: start=0, step=1, limit=4
    $region2: #{tpu_custom_call.1} parent=1 // loop_pre_header
      _
    $region3: #{tpu_custom_call.1} parent=1 // loop_header
      %s16 = sphi 0, %s20
      %p17 = scmp.ge.s32.totalorder %s16, 4
      %s26 = sphi 0, %s28
      %s29 = sphi 0, %s26
      %s30 = sphi 0, %s29
      %s46 = sphi 0, %s30
      %s52 = sphi 0, %s54
      %s55 = sphi 0, %s52
      %s56 = sphi 0, %s55
      %s72 = sphi 0, %s56
      %s76 = sphi 0, %s76
      %s78 = sphi 0, %s76
      %s79 = sphi 0, %s78
      %s93 = sphi 0, %s79
      %s97 = sphi 0, %s97
      %s99 = sphi 0, %s97
      %s100 = sphi 0, %s99
      %s114 = sphi 0, %s100
      %s118 = sphi 0, %s118
      %s120 = sphi 0, %s118
      %s121 = sphi 0, %s120
      %s135 = sphi 0, %s121
      %s139 = sphi 0, %s139
      %s141 = sphi 0, %s139
      %s142 = sphi 0, %s141
      %s156 = sphi 0, %s142
      %s160 = sphi 0, %s160
      %s162 = sphi 0, %s160
      %s163 = sphi 0, %s162
      %s177 = sphi 0, %s163
      %s183 = sphi 0, %s185
      %s186 = sphi 0, %s183
      %s187 = sphi 0, %s186
      %s203 = sphi 0, %s187
    $region4: #{tpu_custom_call.1} parent=1 // loop_header_branch
      %19 = sbr.rel (%p17) target = $region8
    $region5: #{tpu_custom_call.1} parent=1 // loop_body
      %s21 = ssub.s32 %s16, 1
      %s22 = ssub.s32 %s16, 2
      %s23 = sadd.s32 %s16, 1
      %s24 = ssub.s32 %s16, %s23
      %p25 = scmp.eq.s32.totalorder %s24, 0
      %s27 = sadd.s32 %s26, 1
      %s28 = scalar_select %p25, %s26, %s27
      %p31 = pneg %p25
      %p32 = scmp.eq.s32.totalorder %s16, 1
      %p33 = por %p31, %p32
      %p34 = scmp.ne.s32.totalorder %s26, %s29
      %p35 = scmp.eq.s32.totalorder %s16, 0
      %p36 = por %p34, %p35
      %p37 = scmp.ne.s32.totalorder %s26, %s29
      %p38 = scmp.eq.s32.totalorder %s21, 1
      %p39 = por %p37, %p38
      %p40 = scmp.ne.s32.totalorder %s29, %s30
      %p41 = scmp.eq.s32.totalorder %s21, 0
      %p42 = por %p40, %p41
      %p43 = scmp.ne.s32.totalorder %s29, %s30
      %p44 = scmp.eq.s32.totalorder %s22, 1
      %p45 = por %p43, %p44
      %p47 = scmp.ne.s32.totalorder %s30, %s46
      %p48 = scmp.eq.s32.totalorder %s22, 0
      %p49 = por %p47, %p48
      %s50 = ssub.s32 %s16, %s23
      %p51 = scmp.eq.s32.totalorder %s50, 0
      %s53 = sadd.s32 %s52, 1
      %s54 = scalar_select %p51, %s52, %s53
      %p57 = pneg %p51
      %p58 = scmp.eq.s32.totalorder %s16, 1
      %p59 = por %p57, %p58
      %p60 = scmp.ne.s32.totalorder %s52, %s55
      %p61 = scmp.eq.s32.totalorder %s16, 0
      %p62 = por %p60, %p61
      %p63 = scmp.ne.s32.totalorder %s52, %s55
      %p64 = scmp.eq.s32.totalorder %s21, 1
      %p65 = por %p63, %p64
      %p66 = scmp.ne.s32.totalorder %s55, %s56
      %p67 = scmp.eq.s32.totalorder %s21, 0
      %p68 = por %p66, %p67
      %p69 = scmp.ne.s32.totalorder %s55, %s56
      %p70 = scmp.eq.s32.totalorder %s22, 1
      %p71 = por %p69, %p70
      %p73 = scmp.ne.s32.totalorder %s56, %s72
      %p74 = scmp.eq.s32.totalorder %s22, 0
      %p75 = por %p73, %p74
      %s77 = sadd.s32 %s76, 1
      %p80 = scmp.eq.s32.totalorder %s16, 1
      %p81 = scmp.ne.s32.totalorder %s76, %s78
      %p82 = scmp.eq.s32.totalorder %s16, 0
      %p83 = por %p81, %p82
      %p84 = scmp.ne.s32.totalorder %s76, %s78
      %p85 = scmp.eq.s32.totalorder %s21, 1
      %p86 = por %p84, %p85
      %p87 = scmp.ne.s32.totalorder %s78, %s79
      %p88 = scmp.eq.s32.totalorder %s21, 0
      %p89 = por %p87, %p88
      %p90 = scmp.ne.s32.totalorder %s78, %s79
      %p91 = scmp.eq.s32.totalorder %s22, 1
      %p92 = por %p90, %p91
      %p94 = scmp.ne.s32.totalorder %s79, %s93
      %p95 = scmp.eq.s32.totalorder %s22, 0
      %p96 = por %p94, %p95
      %s98 = sadd.s32 %s97, 1
      %p101 = scmp.eq.s32.totalorder %s16, 1
      %p102 = scmp.ne.s32.totalorder %s97, %s99
      %p103 = scmp.eq.s32.totalorder %s16, 0
      %p104 = por %p102, %p103
      %p105 = scmp.ne.s32.totalorder %s97, %s99
      %p106 = scmp.eq.s32.totalorder %s21, 1
      %p107 = por %p105, %p106
      %p108 = scmp.ne.s32.totalorder %s99, %s100
      %p109 = scmp.eq.s32.totalorder %s21, 0
      %p110 = por %p108, %p109
      %p111 = scmp.ne.s32.totalorder %s99, %s100
      %p112 = scmp.eq.s32.totalorder %s22, 1
      %p113 = por %p111, %p112
      %p115 = scmp.ne.s32.totalorder %s100, %s114
      %p116 = scmp.eq.s32.totalorder %s22, 0
      %p117 = por %p115, %p116
      %s119 = sadd.s32 %s118, 1
      %p122 = scmp.eq.s32.totalorder %s16, 1
      %p123 = scmp.ne.s32.totalorder %s118, %s120
      %p124 = scmp.eq.s32.totalorder %s16, 0
      %p125 = por %p123, %p124
      %p126 = scmp.ne.s32.totalorder %s118, %s120
      %p127 = scmp.eq.s32.totalorder %s21, 1
      %p128 = por %p126, %p127
      %p129 = scmp.ne.s32.totalorder %s120, %s121
      %p130 = scmp.eq.s32.totalorder %s21, 0
      %p131 = por %p129, %p130
      %p132 = scmp.ne.s32.totalorder %s120, %s121
      %p133 = scmp.eq.s32.totalorder %s22, 1
      %p134 = por %p132, %p133
      %p136 = scmp.ne.s32.totalorder %s121, %s135
      %p137 = scmp.eq.s32.totalorder %s22, 0
      %p138 = por %p136, %p137
      %s140 = sadd.s32 %s139, 1
      %p143 = scmp.eq.s32.totalorder %s16, 1
      %p144 = scmp.ne.s32.totalorder %s139, %s141
      %p145 = scmp.eq.s32.totalorder %s16, 0
      %p146 = por %p144, %p145
      %p147 = scmp.ne.s32.totalorder %s139, %s141
      %p148 = scmp.eq.s32.totalorder %s21, 1
      %p149 = por %p147, %p148
      %p150 = scmp.ne.s32.totalorder %s141, %s142
      %p151 = scmp.eq.s32.totalorder %s21, 0
      %p152 = por %p150, %p151
      %p153 = scmp.ne.s32.totalorder %s141, %s142
      %p154 = scmp.eq.s32.totalorder %s22, 1
      %p155 = por %p153, %p154
      %p157 = scmp.ne.s32.totalorder %s142, %s156
      %p158 = scmp.eq.s32.totalorder %s22, 0
      %p159 = por %p157, %p158
      %s161 = sadd.s32 %s160, 1
      %p164 = scmp.eq.s32.totalorder %s16, 1
      %p165 = scmp.ne.s32.totalorder %s160, %s162
      %p166 = scmp.eq.s32.totalorder %s16, 0
      %p167 = por %p165, %p166
      %p168 = scmp.ne.s32.totalorder %s160, %s162
      %p169 = scmp.eq.s32.totalorder %s21, 1
      %p170 = por %p168, %p169
      %p171 = scmp.ne.s32.totalorder %s162, %s163
      %p172 = scmp.eq.s32.totalorder %s21, 0
      %p173 = por %p171, %p172
      %p174 = scmp.ne.s32.totalorder %s162, %s163
      %p175 = scmp.eq.s32.totalorder %s22, 1
      %p176 = por %p174, %p175
      %p178 = scmp.ne.s32.totalorder %s163, %s177
      %p179 = scmp.eq.s32.totalorder %s22, 0
      %p180 = por %p178, %p179
      %s181 = ssub.s32 %s16, %s23
      %p182 = scmp.eq.s32.totalorder %s181, 0
      %s184 = sadd.s32 %s183, 1
      %s185 = scalar_select %p182, %s183, %s184
      %p188 = pneg %p182
      %p189 = scmp.eq.s32.totalorder %s16, 1
      %p190 = por %p188, %p189
      %p191 = scmp.ne.s32.totalorder %s183, %s186
      %p192 = scmp.eq.s32.totalorder %s16, 0
      %p193 = por %p191, %p192
      %p194 = scmp.ne.s32.totalorder %s183, %s186
      %p195 = scmp.eq.s32.totalorder %s21, 1
      %p196 = por %p194, %p195
      %p197 = scmp.ne.s32.totalorder %s186, %s187
      %p198 = scmp.eq.s32.totalorder %s21, 0
      %p199 = por %p197, %p198
      %p200 = scmp.ne.s32.totalorder %s186, %s187
      %p201 = scmp.eq.s32.totalorder %s22, 1
      %p202 = por %p200, %p201
      %p204 = scmp.ne.s32.totalorder %s187, %s203
      %p205 = scmp.eq.s32.totalorder %s22, 0
      %p206 = por %p204, %p205
      %p207 = scmp.le.s32.totalorder 1, %s16
      %p208 = scmp.lt.s32.totalorder %s16, 3
      %p209 = pnand %p207, %p208
      %p210 = pneg %p209
      // Predicated region
      $region9: #{tpu_custom_call.1} parent=5 // pred_check
        _
      $region10: #{tpu_custom_call.1} parent=5 // pred_check_branch
        %212 = sbr.rel (%p209) target = $region12
      $region11: #{tpu_custom_call.1} parent=5 // pred_region
        %s213 = ssub.s32 %s16, 1
        // Predicated region
        $region13: #{tpu_custom_call.1} parent=11 // pred_check
          %p214 = pneg %p89
        $region14: #{tpu_custom_call.1} parent=11 // pred_check_branch
          %216 = sbr.rel (%p214) target = $region16
        $region15: #{tpu_custom_call.1} parent=11 // pred_region
          _
        $region16: #{tpu_custom_call.1} parent=11 // pred_fallthru
          _
        // Predicated region
        $region17: #{tpu_custom_call.1} parent=11 // pred_check
          %p217 = pneg %p110
        $region18: #{tpu_custom_call.1} parent=11 // pred_check_branch
          %219 = sbr.rel (%p217) target = $region20
        $region19: #{tpu_custom_call.1} parent=11 // pred_region
          _
        $region20: #{tpu_custom_call.1} parent=11 // pred_fallthru
          _
        // Predicated region
        $region21: #{tpu_custom_call.1} parent=11 // pred_check
          %p220 = pneg %p131
        $region22: #{tpu_custom_call.1} parent=11 // pred_check_branch
          %222 = sbr.rel (%p220) target = $region24
        $region23: #{tpu_custom_call.1} parent=11 // pred_region
          _
        $region24: #{tpu_custom_call.1} parent=11 // pred_fallthru
          _
        // Predicated region
        $region25: #{tpu_custom_call.1} parent=11 // pred_check
          %p223 = pneg %p152
        $region26: #{tpu_custom_call.1} parent=11 // pred_check_branch
          %225 = sbr.rel (%p223) target = $region28
        $region27: #{tpu_custom_call.1} parent=11 // pred_region
          _
        $region28: #{tpu_custom_call.1} parent=11 // pred_fallthru
          _
        // Predicated region
        $region29: #{tpu_custom_call.1} parent=11 // pred_check
          %p226 = pneg %p173
        $region30: #{tpu_custom_call.1} parent=11 // pred_check_branch
          %228 = sbr.rel (%p226) target = $region32
        $region31: #{tpu_custom_call.1} parent=11 // pred_region
          _
        $region32: #{tpu_custom_call.1} parent=11 // pred_fallthru
          _
      $region12: #{tpu_custom_call.1} parent=5 // pred_fallthru
        _
      %p229 = scmp.lt.s32.totalorder %s16, 2
      // Predicated region
      $region33: #{tpu_custom_call.1} parent=5 // pred_check
        %p230 = pneg %p229
      $region34: #{tpu_custom_call.1} parent=5 // pred_check_branch
        %232 = sbr.rel (%p230) target = $region36
      $region35: #{tpu_custom_call.1} parent=5 // pred_region
        // Predicated region
        $region37: #{tpu_custom_call.1} parent=35 // pred_check
          %p233 = pneg %p36
        $region38: #{tpu_custom_call.1} parent=35 // pred_check_branch
          %235 = sbr.rel (%p233) target = $region40
        $region39: #{tpu_custom_call.1} parent=35 // pred_region
          %p236 = scmp.lt.s32.totalorder %s16, 1
          %s237 = scalar_select %p236, %s16, 1
          %s238 = smul.addr %s237, 8
          %s239 = scalar_lea.vmem %s0, %s238
        $region40: #{tpu_custom_call.1} parent=35 // pred_fallthru
          _
        // Predicated region
        $region41: #{tpu_custom_call.1} parent=35 // pred_check
          %p240 = pneg %p62
        $region42: #{tpu_custom_call.1} parent=35 // pred_check_branch
          %242 = sbr.rel (%p240) target = $region44
        $region43: #{tpu_custom_call.1} parent=35 // pred_region
          %s243 = smul.u32 2, %s16
          %p244 = scmp.lt.s32.totalorder %s243, 3
          %s245 = scalar_select %p244, %s243, 3
          %s246 = smul.addr %s245, 8
          %s247 = scalar_lea.vmem %s1, %s246
          %s248 = smul.u32 2, %s16
        $region44: #{tpu_custom_call.1} parent=35 // pred_fallthru
          _
      $region36: #{tpu_custom_call.1} parent=5 // pred_fallthru
        _
      %p249 = scmp.le.s32.totalorder 1, %s16
      %p250 = scmp.lt.s32.totalorder %s16, 3
      %p251 = pnand %p249, %p250
      %p252 = pneg %p251
      // Predicated region
      $region45: #{tpu_custom_call.1} parent=5 // pred_check
        _
      $region46: #{tpu_custom_call.1} parent=5 // pred_check_branch
        %254 = sbr.rel (%p251) target = $region48
      $region47: #{tpu_custom_call.1} parent=5 // pred_region
        %s255 = ssub.s32 %s16, 1
        %p256 = scmp.lt.s32.totalorder %s21, 1
        %s257 = scalar_select %p256, %s21, 1
        %s258 = smul.addr %s257, 8
        %s259 = scalar_lea.vmem %s0, %s258
        %p260 = pneg %p42
        %p261 = pneg %p39
        %s262 = smul.u32 2, %s21
        %p263 = scmp.lt.s32.totalorder %s262, 3
        %s264 = scalar_select %p263, %s262, 3
        %s265 = smul.addr %s264, 8
        %s266 = scalar_lea.vmem %s1, %s265
        %p267 = pneg %p68
        %p268 = pneg %p65
        %p269 = pneg %p89
        %p270 = pneg %p86
        %p271 = pneg %p110
        %p272 = pneg %p107
        %p273 = pneg %p131
        %p274 = pneg %p128
        %p275 = pneg %p152
        %p276 = pneg %p149
        %p277 = pneg %p173
        %p278 = pneg %p170
        %p279 = pneg %p199
        %p280 = pneg %p196
        %s281 = sand.u32 %s186, 1
        %s282 = scalar_lea.sflag [#allocation3], %s281
        %s283 = sand.u32 %s186, 1
        %s284 = smul.addr %s283, 8
        %s285 = scalar_lea.vmem [#allocation2], %s284
        %p286 = scmp.lt.s32.totalorder %s21, 1
        %s287 = scalar_select %p286, %s21, 1
        %s288 = smul.addr %s287, 8
        %s289 = scalar_lea.vmem %s0, %s288
        %s290 = smul.u32 2, %s21
        %p291 = scmp.lt.s32.totalorder %s290, 3
        %s292 = scalar_select %p291, %s290, 3
        %s293 = smul.addr %s292, 8
        %s294 = scalar_lea.vmem %s1, %s293
        %s295 = smul.u32 2, %s21
        %v296 = vld [vmem:[%s289] sm:$0xff]
        %v297 = vld [vmem:[%s2] sm:$0xff]
        %v298 = vld [vmem:[%s2 + $0x8] sm:$0xff]
        %v299 = vld [vmem:[%s2 + $0x10] sm:$0xff]
        %v300 = vld [vmem:[%s2 + $0x18] sm:$0xff]
        %vm301 = vcmask 261120
        %v303 = vsel %vm301, %v296, 0
        %305 = vmatpush.msra.mxu0 0.0
        %306 = vmatpush.msra.mxu0 0.0
        %307 = vmatpush.msra.mxu0 0.0
        %308 = vmatpush.msra.mxu0 0.0
        %309 = vmatpush.msra.mxu0 0.0
        %310 = vmatpush.msra.mxu0 0.0
        %311 = vmatpush.msra.mxu0 0.0
        %312 = vmatpush.msra.mxu0 0.0
        %313 = vmatpush.msra.mxu0 0.0
        %314 = vmatpush.msra.mxu0 0.0
        %315 = vmatpush.msra.mxu0 0.0
        %316 = vmatpush.msra.mxu0 0.0
        %317 = vmatpush.msra.mxu0 %v300
        %318 = vmatpush.msra.mxu0 %v299
        %319 = vmatpush.msra.mxu0 %v298
        %320 = vmatpush.msra.mxu0 %v297
        %321 = vmatmul.f32.gmra.mxu0 %v303
        %v322 = vpop.f32.mrf.mxu0
        %v323 = vadd.f32 0.0, %v322
        %324 = vdwg.mxu0
        %v325 = vld [vmem:[%s294] sm:$0xff]
        %v326 = vld [vmem:[%s294 + $0x8] sm:$0xff]
        %v327 = vld [vmem:[%s3] sm:$0xff]
        %v328 = vld [vmem:[%s3 + $0x8] sm:$0xff]
        %v329 = vld [vmem:[%s3 + $0x10] sm:$0xff]
        %v330 = vld [vmem:[%s3 + $0x18] sm:$0xff]
        %v332 = vsel %vm301, %v325, 0
        %v335 = vsel %vm301, %v326, 0
        %337 = vmatpush.msra.mxu0 0.0
        %338 = vmatpush.msra.mxu0 0.0
        %339 = vmatpush.msra.mxu0 0.0
        %340 = vmatpush.msra.mxu0 0.0
        %341 = vmatpush.msra.mxu0 0.0
        %342 = vmatpush.msra.mxu0 0.0
        %343 = vmatpush.msra.mxu0 0.0
        %344 = vmatpush.msra.mxu0 0.0
        %345 = vmatpush.msra.mxu0 0.0
        %346 = vmatpush.msra.mxu0 0.0
        %347 = vmatpush.msra.mxu0 0.0
        %348 = vmatpush.msra.mxu0 0.0
        %349 = vmatpush.msra.mxu0 %v330
        %350 = vmatpush.msra.mxu0 %v329
        %351 = vmatpush.msra.mxu0 %v328
        %352 = vmatpush.msra.mxu0 %v327
        %353 = vmatmul.f32.gmra.mxu0 %v332
        %v354 = vpop.f32.mrf.mxu0
        %v355 = vadd.f32 0.0, %v354
        %356 = vmatmul.f32.gmra.mxu0 %v335
        %v357 = vpop.f32.mrf.mxu0
        %v358 = vadd.f32 0.0, %v357
        %359 = vdwg.mxu0
        %v360 = vld [vmem:[%s6] sm:$0xff]
        %v361 = vld [vmem:[%s6 + $0x8] sm:$0xff]
        %v362 = vld [vmem:[%s6 + $0x10] sm:$0xff]
        %v363 = vld [vmem:[%s6 + $0x18] sm:$0xff]
        %v364 = vld [vmem:[%s6 + $0x20] sm:$0xff]
        %v365 = vld [vmem:[%s6 + $0x28] sm:$0xff]
        %v366 = vld [vmem:[%s6 + $0x30] sm:$0xff]
        %v367 = vld [vmem:[%s6 + $0x38] sm:$0xff]
        %v368 = vld [vmem:[%s6 + $0x40] sm:$0xff]
        %v369 = vld [vmem:[%s6 + $0x48] sm:$0xff]
        %v370 = vld [vmem:[%s6 + $0x50] sm:$0xff]
        %v371 = vld [vmem:[%s6 + $0x58] sm:$0xff]
        %v372 = vld [vmem:[%s6 + $0x60] sm:$0xff]
        %v373 = vld [vmem:[%s6 + $0x68] sm:$0xff]
        %v374 = vld [vmem:[%s6 + $0x70] sm:$0xff]
        %v375 = vld [vmem:[%s6 + $0x78] sm:$0xff]
        %v376 = vmul.f32 %v355, %v360
        %v377 = vmul.f32 %v358, %v361
        %v378 = vmul.f32 %v355, %v362
        %v379 = vmul.f32 %v358, %v363
        %v380 = vmul.f32 %v355, %v364
        %v381 = vmul.f32 %v358, %v365
        %v382 = vmul.f32 %v355, %v366
        %v383 = vmul.f32 %v358, %v367
        %v384 = vmul.f32 %v355, %v368
        %v385 = vmul.f32 %v358, %v369
        %v386 = vmul.f32 %v355, %v370
        %v387 = vmul.f32 %v358, %v371
        %v388 = vmul.f32 %v355, %v372
        %v389 = vmul.f32 %v358, %v373
        %v390 = vmul.f32 %v355, %v374
        %v391 = vmul.f32 %v358, %v375
        %408 = vrot.lane.b32.xlu0 %v360, 32
        %v409 = vpop.permute.xlu0 %408
        %410 = vrot.lane.b32.xlu0 %v361, 32
        %v411 = vpop.permute.xlu0 %410
        %412 = vrot.lane.b32.xlu0 %v362, 32
        %v413 = vpop.permute.xlu0 %412
        %414 = vrot.lane.b32.xlu0 %v363, 32
        %v415 = vpop.permute.xlu0 %414
        %416 = vrot.lane.b32.xlu0 %v364, 32
        %v417 = vpop.permute.xlu0 %416
        %418 = vrot.lane.b32.xlu0 %v365, 32
        %v419 = vpop.permute.xlu0 %418
        %420 = vrot.lane.b32.xlu0 %v366, 32
        %v421 = vpop.permute.xlu0 %420
        %422 = vrot.lane.b32.xlu0 %v367, 32
        %v423 = vpop.permute.xlu0 %422
        %424 = vrot.lane.b32.xlu0 %v368, 32
        %v425 = vpop.permute.xlu0 %424
        %426 = vrot.lane.b32.xlu0 %v369, 32
        %v427 = vpop.permute.xlu0 %426
        %428 = vrot.lane.b32.xlu0 %v370, 32
        %v429 = vpop.permute.xlu0 %428
        %430 = vrot.lane.b32.xlu0 %v371, 32
        %v431 = vpop.permute.xlu0 %430
        %432 = vrot.lane.b32.xlu0 %v372, 32
        %v433 = vpop.permute.xlu0 %432
        %434 = vrot.lane.b32.xlu0 %v373, 32
        %v435 = vpop.permute.xlu0 %434
        %436 = vrot.lane.b32.xlu0 %v374, 32
        %v437 = vpop.permute.xlu0 %436
        %438 = vrot.lane.b32.xlu0 %v375, 32
        %v439 = vpop.permute.xlu0 %438
        %v456 = vmul.f32 %v355, %v409
        %v457 = vmul.f32 %v358, %v411
        %v458 = vmul.f32 %v355, %v413
        %v459 = vmul.f32 %v358, %v415
        %v460 = vmul.f32 %v355, %v417
        %v461 = vmul.f32 %v358, %v419
        %v462 = vmul.f32 %v355, %v421
        %v463 = vmul.f32 %v358, %v423
        %v464 = vmul.f32 %v355, %v425
        %v465 = vmul.f32 %v358, %v427
        %v466 = vmul.f32 %v355, %v429
        %v467 = vmul.f32 %v358, %v431
        %v468 = vmul.f32 %v355, %v433
        %v469 = vmul.f32 %v358, %v435
        %v470 = vmul.f32 %v355, %v437
        %v471 = vmul.f32 %v358, %v439
        %v473 = vsel %vm301, %v323, 0
        %v476 = vsel %vm301, %v376, 0
        %v479 = vsel %vm301, %v377, 0
        %v482 = vsel %vm301, %v378, 0
        %v485 = vsel %vm301, %v379, 0
        %v488 = vsel %vm301, %v380, 0
        %v491 = vsel %vm301, %v381, 0
        %v494 = vsel %vm301, %v382, 0
        %v497 = vsel %vm301, %v383, 0
        %v500 = vsel %vm301, %v384, 0
        %v503 = vsel %vm301, %v385, 0
        %v506 = vsel %vm301, %v386, 0
        %v509 = vsel %vm301, %v387, 0
        %v512 = vsel %vm301, %v388, 0
        %v515 = vsel %vm301, %v389, 0
        %v518 = vsel %vm301, %v390, 0
        %v521 = vsel %vm301, %v391, 0
        %523 = vmatpush.xpose.msra.mxu0 %v521
        %524 = vmatpush.xpose.msra.mxu0 %v518
        %525 = vmatpush.xpose.msra.mxu0 %v515
        %526 = vmatpush.xpose.msra.mxu0 %v512
        %527 = vmatpush.xpose.msra.mxu0 %v509
        %528 = vmatpush.xpose.msra.mxu0 %v506
        %529 = vmatpush.xpose.msra.mxu0 %v503
        %530 = vmatpush.xpose.msra.mxu0 %v500
        %531 = vmatpush.xpose.msra.mxu0 %v497
        %532 = vmatpush.xpose.msra.mxu0 %v494
        %533 = vmatpush.xpose.msra.mxu0 %v491
        %534 = vmatpush.xpose.msra.mxu0 %v488
        %535 = vmatpush.xpose.msra.mxu0 %v485
        %536 = vmatpush.xpose.msra.mxu0 %v482
        %537 = vmatpush.xpose.msra.mxu0 %v479
        %538 = vmatpush.xpose.msra.mxu0 %v476
        %539 = vmatmul.f32.gmra.mxu0 %v473
        %v540 = vpop.f32.mrf.mxu0
        %v541 = vadd.f32 0.0, %v540
        %542 = vdwg.mxu0
        %543 = vmax.xlane.f32.xlu0 %v541
        %v544 = vpop.xlane.xlu0 %543
        %v545 = vsub.f32 %v541, %v544
        %v546 = vmul.f32 %v545, 1.442695
        %v547 = vpow.pop %v546
        %564 = vrot.lane.b32.xlu0 %v456, 96
        %v565 = vpop.permute.xlu0 %564
        %566 = vrot.lane.b32.xlu0 %v457, 96
        %v567 = vpop.permute.xlu0 %566
        %568 = vrot.lane.b32.xlu0 %v458, 96
        %v569 = vpop.permute.xlu0 %568
        %570 = vrot.lane.b32.xlu0 %v459, 96
        %v571 = vpop.permute.xlu0 %570
        %572 = vrot.lane.b32.xlu0 %v460, 96
        %v573 = vpop.permute.xlu0 %572
        %574 = vrot.lane.b32.xlu0 %v461, 96
        %v575 = vpop.permute.xlu0 %574
        %576 = vrot.lane.b32.xlu0 %v462, 96
        %v577 = vpop.permute.xlu0 %576
        %578 = vrot.lane.b32.xlu0 %v463, 96
        %v579 = vpop.permute.xlu0 %578
        %580 = vrot.lane.b32.xlu0 %v464, 96
        %v581 = vpop.permute.xlu0 %580
        %582 = vrot.lane.b32.xlu0 %v465, 96
        %v583 = vpop.permute.xlu0 %582
        %584 = vrot.lane.b32.xlu0 %v466, 96
        %v585 = vpop.permute.xlu0 %584
        %586 = vrot.lane.b32.xlu0 %v467, 96
        %v587 = vpop.permute.xlu0 %586
        %588 = vrot.lane.b32.xlu0 %v468, 96
        %v589 = vpop.permute.xlu0 %588
        %590 = vrot.lane.b32.xlu0 %v469, 96
        %v591 = vpop.permute.xlu0 %590
        %592 = vrot.lane.b32.xlu0 %v470, 96
        %v593 = vpop.permute.xlu0 %592
        %594 = vrot.lane.b32.xlu0 %v471, 96
        %v595 = vpop.permute.xlu0 %594
        %612 = vmatpush.msra.mxu0 %v595
        %613 = vmatpush.msra.mxu0 %v593
        %614 = vmatpush.msra.mxu0 %v591
        %615 = vmatpush.msra.mxu0 %v589
        %616 = vmatpush.msra.mxu0 %v587
        %617 = vmatpush.msra.mxu0 %v585
        %618 = vmatpush.msra.mxu0 %v583
        %619 = vmatpush.msra.mxu0 %v581
        %620 = vmatpush.msra.mxu0 %v579
        %621 = vmatpush.msra.mxu0 %v577
        %622 = vmatpush.msra.mxu0 %v575
        %623 = vmatpush.msra.mxu0 %v573
        %624 = vmatpush.msra.mxu0 %v571
        %625 = vmatpush.msra.mxu0 %v569
        %626 = vmatpush.msra.mxu0 %v567
        %627 = vmatpush.msra.mxu0 %v565
        %628 = vmatmul.f32.gmra.mxu0 %v547
        %v629 = vpop.f32.mrf.mxu0
        %v630 = vadd.f32 0.0, %v629
        %631 = vdwg.mxu0
        %632 = vmatpush.msra.mxu0 %v375
        %633 = vmatpush.msra.mxu0 %v374
        %634 = vmatpush.msra.mxu0 %v373
        %635 = vmatpush.msra.mxu0 %v372
        %636 = vmatpush.msra.mxu0 %v371
        %637 = vmatpush.msra.mxu0 %v370
        %638 = vmatpush.msra.mxu0 %v369
        %639 = vmatpush.msra.mxu0 %v368
        %640 = vmatpush.msra.mxu0 %v367
        %641 = vmatpush.msra.mxu0 %v366
        %642 = vmatpush.msra.mxu0 %v365
        %643 = vmatpush.msra.mxu0 %v364
        %644 = vmatpush.msra.mxu0 %v363
        %645 = vmatpush.msra.mxu0 %v362
        %646 = vmatpush.msra.mxu0 %v361
        %647 = vmatpush.msra.mxu0 %v360
        %648 = vmatmul.f32.gmra.mxu0 %v547
        %v649 = vpop.f32.mrf.mxu0
        %v650 = vadd.f32 0.0, %v649
        %651 = vdwg.mxu0
        %v652 = vrcp.pop %v650
        %v653 = vmul.f32 %v630, %v652
        %v654 = vld [vmem:[%s4] sm:$0xff]
        %v655 = vld [vmem:[%s4 + $0x8] sm:$0xff]
        %v656 = vld [vmem:[%s4 + $0x10] sm:$0xff]
        %v657 = vld [vmem:[%s4 + $0x18] sm:$0xff]
        %v658 = vld [vmem:[%s5] sm:$0x1]
        %v660 = vperm.slane %v658, 0
        %v663 = vsel %vm301, %v653, 0
        %665 = vmatpush.msra.mxu0 0.0
        %666 = vmatpush.msra.mxu0 0.0
        %667 = vmatpush.msra.mxu0 0.0
        %668 = vmatpush.msra.mxu0 0.0
        %669 = vmatpush.msra.mxu0 0.0
        %670 = vmatpush.msra.mxu0 0.0
        %671 = vmatpush.msra.mxu0 0.0
        %672 = vmatpush.msra.mxu0 0.0
        %673 = vmatpush.msra.mxu0 0.0
        %674 = vmatpush.msra.mxu0 0.0
        %675 = vmatpush.msra.mxu0 0.0
        %676 = vmatpush.msra.mxu0 0.0
        %677 = vmatpush.msra.mxu0 %v657
        %678 = vmatpush.msra.mxu0 %v656
        %679 = vmatpush.msra.mxu0 %v655
        %680 = vmatpush.msra.mxu0 %v654
        %681 = vmatmul.f32.gmra.mxu0 %v663
        %v682 = vpop.f32.mrf.mxu0
        %v683 = vadd.f32 %v660, %v682
        %684 = vdwg.mxu0
        %685 = vst.msk [vmem:[%s285] sm:$0xff] %vm301, %v683
        %s686 = sand.u32 %s186, 1
        %s687 = scalar_lea.sflag [#allocation3], %s686
        %s688 = sand.u32 %s186, 1
        %s689 = smul.addr %s688, 8
        %s690 = scalar_lea.vmem [#allocation2], %s689
        // Predicated region
        $region49: #{tpu_custom_call.1} parent=47 // pred_check
          %p691 = pneg %p196
        $region50: #{tpu_custom_call.1} parent=47 // pred_check_branch
          %693 = sbr.rel (%p691) target = $region52
        $region51: #{tpu_custom_call.1} parent=47 // pred_region
          %695 = vsyncadd %s687, 0
          %s696 = smul.addr %s21, 8
          %s697 = scalar_lea.hbm %s7, %s696
          %s699 = sshll.u32 %s690, 4
          %s700 = int_to_ptr.vmem [resolvable:$true] %s699
          %s701 = sshll.u32 %s697, 4
          %s702 = int_to_ptr.hbm [resolvable:$true] %s701
          %704 = dma.vmem_to_hbm [thread:$0]  %s700, 128, %s702, %s687
        $region52: #{tpu_custom_call.1} parent=47 // pred_fallthru
          _
      $region48: #{tpu_custom_call.1} parent=5 // pred_fallthru
        _
      %p705 = scmp.le.s32.totalorder 2, %s16
      // Predicated region
      $region53: #{tpu_custom_call.1} parent=5 // pred_check
        %p706 = pneg %p705
      $region54: #{tpu_custom_call.1} parent=5 // pred_check_branch
        %708 = sbr.rel (%p706) target = $region56
      $region55: #{tpu_custom_call.1} parent=5 // pred_region
        %s709 = ssub.s32 %s16, 2
        // Predicated region
        $region57: #{tpu_custom_call.1} parent=55 // pred_check
          %p710 = pneg %p202
        $region58: #{tpu_custom_call.1} parent=55 // pred_check_branch
          %712 = sbr.rel (%p710) target = $region60
        $region59: #{tpu_custom_call.1} parent=55 // pred_region
          %s713 = sand.u32 %s187, 1
          %s714 = scalar_lea.sflag [#allocation3], %s713
          %s715 = sand.u32 %s187, 1
          %s716 = smul.addr %s715, 8
          %s717 = scalar_lea.vmem [#allocation2], %s716
          %719 = dma.done %s714, 128
        $region60: #{tpu_custom_call.1} parent=55 // pred_fallthru
          _
      $region56: #{tpu_custom_call.1} parent=5 // pred_fallthru
        _
    $region6: #{tpu_custom_call.1} parent=1 // loop_footer
      %s20 = sadd.s32 1, %s16
    $region7: #{tpu_custom_call.1} parent=1 // loop_footer_branch
      %15 = sbr.rel target = $region3
    $region8: #{tpu_custom_call.1} parent=1 // loop_exit
      _
    %720 = vsyncpa [#allocation3], 1
    %s721 = scalar_lea.sflag [#allocation3], 1
    %722 = vsyncpa %s721, 1

</llo_original>
